<compile_context>
chip_gen: v5e
topology: v5e:2x2
jax: 0.10.0
libtpu: 0.0.40
codegen_flags: <defaults>
</compile_context>

<pallas_src>
import math

import jax
import jax.numpy as jnp
from jax.experimental import pallas as pl
from jax.experimental.pallas import tpu as pltpu

_LANE = 128
_SUBLANE = 8


def _mlp_kernel(x_ref, w1_ref, b1_ref, w2_ref, b2_ref, o_ref):
    # x_ref:  (TB, D)   VMEM tile of the batch (f32 or bf16)
    # w1_ref: (D, H1)   full weight, resident across grid steps
    # b1_ref: (1, H1)   f32
    # w2_ref: (1, H1)   fc2 weight as a row, f32
    # b2_ref: (1, 1)    SMEM scalar, f32
    # o_ref:  (TB, 1)   f32
    h = jnp.dot(x_ref[...], w1_ref[...], preferred_element_type=jnp.float32)
    h = jnp.maximum(h + b1_ref[...], 0.0)                      # bias + ReLU (VPU, f32)
    # fc2 with a single output feature: VPU multiply + XLU lane-reduce; avoids an
    # MXU push/pop for a 1-lane result.  mean(dim=1) over size-1 axis folded away.
    y = jnp.sum(h * w2_ref[...], axis=1, keepdims=True) + b2_ref[0, 0]
    o_ref[...] = y


def _vmem_capacity_bytes():
    """Per-core VMEM capacity; conservative fallback if the query is unavailable."""
    try:
        cap = int(pltpu.get_tpu_info().vmem_capacity_bytes)
        if cap > 0:
            return cap
    except Exception:
        pass
    return 64 << 20  # v7x per-TensorCore figure (most conservative generation)


def _round_down8(v):
    return max(_SUBLANE, (v // _SUBLANE) * _SUBLANE)


def _pick_tile(B, D, elem_bytes, cap, tile_override=None):
    """Return (tile_b, num_blocks). Byte-based tile sizing, no host-side padding."""
    if tile_override is not None:                      # testing knob only
        tile_b = _round_down8(tile_override)
        if tile_b >= B:
            return B, 1
        return tile_b, -(-B // tile_b)

    # Resident operands: W1 lane-pads H1=8 -> 128 lanes and is double-buffered by
    # the pipeline even though its index_map is constant; budget for it.
    w1_vmem = 2 * D * _LANE * elem_bytes
    misc_vmem = 4 * _SUBLANE * _LANE * 4               # b1 + W2 row, double-buffered
    usable = cap // 2 - w1_vmem - misc_vmem            # keep within ~half of physical
    usable = max(usable, 4 << 20)

    # Per batch-row VMEM: double-buffered x row + double-buffered lane-padded out row.
    per_row = 2 * D * elem_bytes + 2 * _LANE * 4
    rows_by_vmem = _round_down8(usable // per_row)
    # Target ~8 MiB of x bytes per block so the ~0.35us per-step overhead is noise.
    rows_by_target = _round_down8(max(_SUBLANE, (8 << 20) // (D * elem_bytes)))
    tile_b = min(rows_by_vmem, rows_by_target)

    x_bytes = B * D * elem_bytes
    if x_bytes <= (2 << 20) and B <= tile_b:
        return B, 1                                    # tiny input: one block, no pipeline
    if tile_b >= B:
        # DMA-bound but fits one tile: split into >= 2 blocks so the "parallel"
        # batch axis can shard across both v7x TensorCores.
        half = ((-(-B // 2)) + _SUBLANE - 1) // _SUBLANE * _SUBLANE
        if half >= B:
            return B, 1
        tile_b = half
    return tile_b, -(-B // tile_b)


def _vmem_limit_bytes(tile_b, D, elem_bytes, cap):
    need = (2 * tile_b * D * elem_bytes          # x block, double-buffered
            + 2 * tile_b * _LANE * 4             # out block (lane-padded), double-buffered
            + 2 * D * _LANE * elem_bytes         # W1 (lane-padded), double-buffered
            + 4 * _SUBLANE * _LANE * 4           # b1 + W2 row
            + (8 << 20))                         # compiler scratch headroom
    return int(min(max(need, 32 << 20), int(cap * 0.9)))


def simple_mlp_forward(x, w1, b1, w2_row, b2, *, stream_bf16=False, _tile_override=None):
    """x: (B, D) float32. Returns (B,) float32, matching SimpleMLP.forward."""
    B, D = x.shape
    H1 = w1.shape[1]

    if stream_bf16:
        # Stream the HBM-bound operands at half width; MXU accumulates in f32 and
        # all post-matmul math stays f32.
        x = x.astype(jnp.bfloat16)
        w1 = w1.astype(jnp.bfloat16)
    elem_bytes = jnp.dtype(x.dtype).itemsize

    cap = _vmem_capacity_bytes()
    tile_b, num_blocks = _pick_tile(B, D, elem_bytes, cap, _tile_override)
    vmem_limit = _vmem_limit_bytes(tile_b, D, elem_bytes, cap)

    out = pl.pallas_call(
        _mlp_kernel,
        out_shape=jax.ShapeDtypeStruct((B, 1), jnp.float32),
        grid_spec=pltpu.PrefetchScalarGridSpec(
            num_scalar_prefetch=0,
            grid=(num_blocks,),
            in_specs=[
                pl.BlockSpec((tile_b, D), lambda i: (i, 0)),        # x tile (streamed)
                pl.BlockSpec((D, H1), lambda i: (0, 0)),            # W1 (full, resident)
                pl.BlockSpec((1, H1), lambda i: (0, 0)),            # b1
                pl.BlockSpec((1, H1), lambda i: (0, 0)),            # W2 row
                pl.BlockSpec(memory_space=pltpu.MemorySpace.SMEM),  # b2 scalar
            ],
            # Ragged batches: the last (partial) block's out-of-bounds rows are
            # masked by Pallas' boundary handling — no host-side jnp.pad.
            out_specs=pl.BlockSpec((tile_b, 1), lambda i: (i, 0)),
        ),
        compiler_params=pltpu.CompilerParams(
            # "parallel" lets the batch axis shard across v7x's 2 TensorCores
            # whenever num_blocks >= 2.
            dimension_semantics=("parallel",),
            vmem_limit_bytes=vmem_limit),
    )(x, w1, b1, w2_row, b2)
    return out[:, 0]  # (B,)


def init_params(key, input_size, hidden=8):
    """Deterministic init mimicking nn.Linear's U(-1/sqrt(fan_in), 1/sqrt(fan_in))."""
    k1, k2, k3, k4 = jax.random.split(key, 4)
    bound1 = 1.0 / math.sqrt(input_size)
    bound2 = 1.0 / math.sqrt(hidden)
    w1 = jax.random.uniform(k1, (input_size, hidden), jnp.float32, -bound1, bound1)
    b1 = jax.random.uniform(k2, (1, hidden), jnp.float32, -bound1, bound1)
    w2_row = jax.random.uniform(k3, (1, hidden), jnp.float32, -bound2, bound2)
    b2 = jax.random.uniform(k4, (1, 1), jnp.float32, -bound2, bound2)
    return w1, b1, w2_row, b2


def _reference(x, w1, b1, w2_row, b2):
    h = jnp.maximum(x @ w1 + b1, 0.0)
    return jnp.mean(h @ w2_row.T + b2, axis=1)


if __name__ == "__main__":
    key = jax.random.PRNGKey(0)
    kx, kp = jax.random.split(key)

    # Small shapes consistent with the module (hidden fixed at 8 by SimpleMLP).
    B, D, H1 = 16, 256, 8
    x = jax.random.normal(kx, (B, D), jnp.float32)
    w1, b1, w2_row, b2 = init_params(kp, D, H1)

    # 1) Tiny batch -> single-block fast path (no pipelining overhead), exact f32.
    y = jax.block_until_ready(simple_mlp_forward(x, w1, b1, w2_row, b2))
    y_ref = _reference(x, w1, b1, w2_row, b2)
    assert y.shape == (B,)
    assert jnp.allclose(y, y_ref, atol=1e-5, rtol=1e-5)

    # 2) Multi-block + ragged batch: 3 blocks with a masked partial last block
    #    (no host-side padding / extra HBM pass).
    B2 = 20
    x2 = jax.random.normal(jax.random.PRNGKey(1), (B2, D), jnp.float32)
    y2 = jax.block_until_ready(
        simple_mlp_forward(x2, w1, b1, w2_row, b2, _tile_override=8))
    y2_ref = _reference(x2, w1, b1, w2_row, b2)
    assert y2.shape == (B2,)
    assert jnp.allclose(y2, y2_ref, atol=1e-5, rtol=1e-5)

    # 3) Auto-tiling forced >=2-block split on a DMA-bound (4 MiB) input, so the
    #    batch axis actually shards across both v7x TensorCores.
    B3, D3 = 1024, 1024
    x3 = jax.random.normal(jax.random.PRNGKey(2), (B3, D3), jnp.float32)
    p3 = init_params(jax.random.PRNGKey(3), D3, H1)
    y3 = jax.block_until_ready(simple_mlp_forward(x3, *p3))
    y3_ref = _reference(x3, *p3)
    assert y3.shape == (B3,)
    assert jnp.allclose(y3, y3_ref, atol=1e-4, rtol=1e-4)

    # 4) bf16 streaming path (f32 accumulation): ~2x HBM roofline, small drift.
    y4 = jax.block_until_ready(
        simple_mlp_forward(x, w1, b1, w2_row, b2, stream_bf16=True))
    assert y4.shape == (B,)
    assert jnp.allclose(y4, y_ref, atol=3e-2, rtol=3e-2)

    print("KERNEL_OK")
</pallas_src>

<mosaic_0001>
module attributes {stable_mosaic.version = 11 : i64} {
  func.func @_mlp_kernel(%arg0: i32, %arg1: memref<16x256xf32, #tpu.memory_space<vmem>>, %arg2: memref<256x8xf32, #tpu.memory_space<vmem>>, %arg3: memref<1x8xf32, #tpu.memory_space<vmem>>, %arg4: memref<1x8xf32, #tpu.memory_space<vmem>>, %arg5: memref<1x1xf32, #tpu.memory_space<smem>>, %arg6: memref<16x1xf32, #tpu.memory_space<vmem>>) attributes {dimension_semantics = [#tpu.dimension_semantics<parallel>], iteration_bounds = array<i64: 1>, scalar_prefetch = 0 : i64, scratch_operands = 0 : i64, tpu.core_type = #tpu.core_type<tc>, window_params = [{transform_indices = @transform_0, window_bounds = array<i64: 16, 256>}, {pipeline_mode = #tpu.pipeline_mode<synchronous>, transform_indices = @transform_1, window_bounds = array<i64: 256, 8>}, {pipeline_mode = #tpu.pipeline_mode<synchronous>, transform_indices = @transform_2, window_bounds = array<i64: 1, 8>}, {pipeline_mode = #tpu.pipeline_mode<synchronous>, transform_indices = @transform_3, window_bounds = array<i64: 1, 8>}, {transform_indices = @transform_4, window_bounds = array<i64: 1, 1>}, {transform_indices = @transform_5, window_bounds = array<i64: 16, 1>}]} {
    %c0 = arith.constant 0 : index
    %c0_0 = arith.constant 0 : index
    %0 = vector.load %arg1[%c0, %c0_0] : memref<16x256xf32, #tpu.memory_space<vmem>>, vector<16x256xf32>
    %c0_1 = arith.constant 0 : index
    %c0_2 = arith.constant 0 : index
    %1 = vector.load %arg2[%c0_1, %c0_2] : memref<256x8xf32, #tpu.memory_space<vmem>>, vector<256x8xf32>
    %cst = arith.constant dense<0.000000e+00> : vector<16x8xf32>
    %2 = tpu.matmul %0, %1, %cst {dimension_numbers = #tpu.dot_dimension_numbers<[1], [0], [0], [1], [0, 0, 1, 1], [], []>} : vector<16x256xf32>, vector<256x8xf32>, vector<16x8xf32> -> vector<16x8xf32>
    %c0_3 = arith.constant 0 : index
    %c0_4 = arith.constant 0 : index
    %3 = vector.load %arg3[%c0_3, %c0_4] : memref<1x8xf32, #tpu.memory_space<vmem>>, vector<1x8xf32>
    %4 = vector.broadcast %3 : vector<1x8xf32> to vector<16x8xf32>
    %5 = arith.addf %2, %4 : vector<16x8xf32>
    %cst_5 = arith.constant 0.000000e+00 : f32
    %6 = vector.broadcast %cst_5 : f32 to vector<16x8xf32>
    %7 = arith.maximumf %5, %6 : vector<16x8xf32>
    %c0_6 = arith.constant 0 : index
    %c0_7 = arith.constant 0 : index
    %8 = vector.load %arg4[%c0_6, %c0_7] : memref<1x8xf32, #tpu.memory_space<vmem>>, vector<1x8xf32>
    %9 = vector.broadcast %8 : vector<1x8xf32> to vector<16x8xf32>
    %10 = arith.mulf %7, %9 : vector<16x8xf32>
    %cst_8 = arith.constant dense<0.000000e+00> : vector<16xf32>
    %11 = vector.multi_reduction <add>, %10, %cst_8 [1] : vector<16x8xf32> to vector<16xf32>
    %12 = vector.shape_cast %11 : vector<16xf32> to vector<16x1xf32>
    %c0_9 = arith.constant 0 : index
    %c0_10 = arith.constant 0 : index
    %13 = memref.load %arg5[%c0_9, %c0_10] : memref<1x1xf32, #tpu.memory_space<smem>>
    %14 = vector.broadcast %13 : f32 to vector<16x1xf32>
    %15 = arith.addf %12, %14 : vector<16x1xf32>
    %c0_11 = arith.constant 0 : index
    %c0_12 = arith.constant 0 : index
    %16 = vector.load %arg6[%c0_11, %c0_12] : memref<16x1xf32, #tpu.memory_space<vmem>>, vector<16x1xf32>
    tpu.vector_store %arg6[%c0_11, %c0_12], %15 {strides = array<i32>} : memref<16x1xf32, #tpu.memory_space<vmem>>, vector<16x1xf32>,
    return
  }
  func.func @transform_0(%arg0: i32) -> (i32, i32) {
    %c0_i32 = arith.constant 0 : i32
    %c0_i32_0 = arith.constant 0 : i32
    return %arg0, %c0_i32 : i32, i32
  }
  func.func @transform_1(%arg0: i32) -> (i32, i32) {
    %c0_i32 = arith.constant 0 : i32
    %c0_i32_0 = arith.constant 0 : i32
    %c0_i32_1 = arith.constant 0 : i32
    return %c0_i32, %c0_i32_0 : i32, i32
  }
  func.func @transform_2(%arg0: i32) -> (i32, i32) {
    %c0_i32 = arith.constant 0 : i32
    %c0_i32_0 = arith.constant 0 : i32
    %c0_i32_1 = arith.constant 0 : i32
    return %c0_i32, %c0_i32_0 : i32, i32
  }
  func.func @transform_3(%arg0: i32) -> (i32, i32) {
    %c0_i32 = arith.constant 0 : i32
    %c0_i32_0 = arith.constant 0 : i32
    %c0_i32_1 = arith.constant 0 : i32
    return %c0_i32, %c0_i32_0 : i32, i32
  }
  func.func @transform_4(%arg0: i32) -> (i32, i32) {
    %c0_i32 = arith.constant 0 : i32
    %c0_i32_0 = arith.constant 0 : i32
    %c0_i32_1 = arith.constant 0 : i32
    return %c0_i32, %c0_i32_0 : i32, i32
  }
  func.func @transform_5(%arg0: i32) -> (i32, i32) {
    %c0_i32 = arith.constant 0 : i32
    %c0_i32_0 = arith.constant 0 : i32
    return %arg0, %c0_i32 : i32, i32
  }
}

</mosaic_0001>

<llo_original>
// kernel: tpu_custom_call.1
$region0: #{tpu_custom_call.1}
  #allocation0 [shape = 'u32[]', space=smem, size = 0x4, offset = 0x4, fixed_abs, tag = 'smem constant byte address 0x4 - core index']
  #allocation1 [shape = 'u32[72,128]{1,0:T(1,128)}', space=vmem, size = 0x9000, scoped, tag = 'internal scratch']
  #allocation2 [shape = 'f32[1,1]{1,0:T(1,128)S(6)}', space=smem, size = 0x200, scoped, tag = 'scoped memory for tpu_custom_call.1']
  %s0 = inlined_call_operand.vmem [shape: f32[16,256], index: 0, kind: input, shape index: {}]
  %s1 = inlined_call_operand.vmem [shape: f32[256,8], index: 1, kind: input, shape index: {}]
  %s2 = inlined_call_operand.vmem [shape: f32[1,8], index: 2, kind: input, shape index: {}]
  %s3 = inlined_call_operand.vmem [shape: f32[1,8], index: 3, kind: input, shape index: {}]
  %s4 = inlined_call_operand.<no memory space> [shape: f32[1,1], index: 4, kind: input, shape index: {}]
  %s5 = inlined_call_operand.vmem [shape: f32[16,1], index: 5, kind: output, shape index: {}]
  %s6 = sld [smem:[#allocation0]]
  $region30: #{tpu_custom_call.1} parent=0
    _
  %s8 = ssub.s32 1, %s6
  %s9 = scalar_select 0, %s8, %s6
  %10 = sst [smem:[#allocation2]] %s4
  // Predicated region
  $region2: #{tpu_custom_call.1} parent=0 // pred_check
    _
  $region3: #{tpu_custom_call.1} parent=0 // pred_check_branch
    %12 = sbr.rel (0) target = $region5
  $region4: #{tpu_custom_call.1} parent=0 // pred_region
    _
  $region5: #{tpu_custom_call.1} parent=0 // pred_fallthru
    _
  // Predicated region
  $region6: #{tpu_custom_call.1} parent=0 // pred_check
    _
  $region7: #{tpu_custom_call.1} parent=0 // pred_check_branch
    %14 = sbr.rel (0) target = $region9
  $region8: #{tpu_custom_call.1} parent=0 // pred_region
    _
  $region9: #{tpu_custom_call.1} parent=0 // pred_fallthru
    _
  // Predicated region
  $region10: #{tpu_custom_call.1} parent=0 // pred_check
    _
  $region11: #{tpu_custom_call.1} parent=0 // pred_check_branch
    %16 = sbr.rel (0) target = $region13
  $region12: #{tpu_custom_call.1} parent=0 // pred_region
    _
  $region13: #{tpu_custom_call.1} parent=0 // pred_fallthru
    _
  // Predicated region
  $region14: #{tpu_custom_call.1} parent=0 // pred_check
    _
  $region15: #{tpu_custom_call.1} parent=0 // pred_check_branch
    %18 = sbr.rel (0) target = $region17
  $region16: #{tpu_custom_call.1} parent=0 // pred_region
    _
  $region17: #{tpu_custom_call.1} parent=0 // pred_fallthru
    _
  // Predicated region
  $region18: #{tpu_custom_call.1} parent=0 // pred_check
    _
  $region19: #{tpu_custom_call.1} parent=0 // pred_check_branch
    %20 = sbr.rel (0) target = $region21
  $region20: #{tpu_custom_call.1} parent=0 // pred_region
    _
  $region21: #{tpu_custom_call.1} parent=0 // pred_fallthru
    _
  %v21 = vld [vmem:[%s0] sm:$0xff]
  %v22 = vld [vmem:[%s0 + $0x8] sm:$0xff]
  %v23 = vld [vmem:[%s0 + $0x10] sm:$0xff]
  %v24 = vld [vmem:[%s0 + $0x18] sm:$0xff]
  %v25 = vld [vmem:[%s1] sm:$0xff]
  %v26 = vld [vmem:[%s1 + $0x8] sm:$0xff]
  %v27 = vld [vmem:[%s1 + $0x10] sm:$0xff]
  %v28 = vld [vmem:[%s1 + $0x18] sm:$0xff]
  %v29 = vld [vmem:[%s1 + $0x20] sm:$0xff]
  %v30 = vld [vmem:[%s1 + $0x28] sm:$0xff]
  %v31 = vld [vmem:[%s1 + $0x30] sm:$0xff]
  %v32 = vld [vmem:[%s1 + $0x38] sm:$0xff]
  %v33 = vld [vmem:[%s1 + $0x40] sm:$0xff]
  %v34 = vld [vmem:[%s1 + $0x48] sm:$0xff]
  %v35 = vld [vmem:[%s1 + $0x50] sm:$0xff]
  %v36 = vld [vmem:[%s1 + $0x58] sm:$0xff]
  %v37 = vld [vmem:[%s1 + $0x60] sm:$0xff]
  %v38 = vld [vmem:[%s1 + $0x68] sm:$0xff]
  %v39 = vld [vmem:[%s1 + $0x70] sm:$0xff]
  %v40 = vld [vmem:[%s1 + $0x78] sm:$0xff]
  %v41 = vld [vmem:[%s1 + $0x80] sm:$0xff]
  %v42 = vld [vmem:[%s1 + $0x88] sm:$0xff]
  %v43 = vld [vmem:[%s1 + $0x90] sm:$0xff]
  %v44 = vld [vmem:[%s1 + $0x98] sm:$0xff]
  %v45 = vld [vmem:[%s1 + $0xa0] sm:$0xff]
  %v46 = vld [vmem:[%s1 + $0xa8] sm:$0xff]
  %v47 = vld [vmem:[%s1 + $0xb0] sm:$0xff]
  %v48 = vld [vmem:[%s1 + $0xb8] sm:$0xff]
  %v49 = vld [vmem:[%s1 + $0xc0] sm:$0xff]
  %v50 = vld [vmem:[%s1 + $0xc8] sm:$0xff]
  %v51 = vld [vmem:[%s1 + $0xd0] sm:$0xff]
  %v52 = vld [vmem:[%s1 + $0xd8] sm:$0xff]
  %v53 = vld [vmem:[%s1 + $0xe0] sm:$0xff]
  %v54 = vld [vmem:[%s1 + $0xe8] sm:$0xff]
  %v55 = vld [vmem:[%s1 + $0xf0] sm:$0xff]
  %v56 = vld [vmem:[%s1 + $0xf8] sm:$0xff]
  %v57 = vld [vmem:[%s2] sm:$0x1]
  %v59 = vperm.slane %v57, 0
  %61 = vmatpush.msra.mxu0 %v40
  %62 = vmatpush.msra.mxu0 %v39
  %63 = vmatpush.msra.mxu0 %v38
  %64 = vmatpush.msra.mxu0 %v37
  %65 = vmatpush.msra.mxu0 %v36
  %66 = vmatpush.msra.mxu0 %v35
  %67 = vmatpush.msra.mxu0 %v34
  %68 = vmatpush.msra.mxu0 %v33
  %69 = vmatpush.msra.mxu0 %v32
  %70 = vmatpush.msra.mxu0 %v31
  %71 = vmatpush.msra.mxu0 %v30
  %72 = vmatpush.msra.mxu0 %v29
  %73 = vmatpush.msra.mxu0 %v28
  %74 = vmatpush.msra.mxu0 %v27
  %75 = vmatpush.msra.mxu0 %v26
  %76 = vmatpush.msra.mxu0 %v25
  %77 = vmatmul.f32.gmra.mxu0 %v21
  %v78 = vpop.f32.mrf.mxu0
  %v79 = vadd.f32 %v59, %v78
  %80 = vmatmul.f32.gmra.mxu0 %v23
  %v81 = vpop.f32.mrf.mxu0
  %v82 = vadd.f32 %v59, %v81
  %83 = vdwg.mxu0
  %84 = vmatpush.msra.mxu0 %v56
  %85 = vmatpush.msra.mxu0 %v55
  %86 = vmatpush.msra.mxu0 %v54
  %87 = vmatpush.msra.mxu0 %v53
  %88 = vmatpush.msra.mxu0 %v52
  %89 = vmatpush.msra.mxu0 %v51
  %90 = vmatpush.msra.mxu0 %v50
  %91 = vmatpush.msra.mxu0 %v49
  %92 = vmatpush.msra.mxu0 %v48
  %93 = vmatpush.msra.mxu0 %v47
  %94 = vmatpush.msra.mxu0 %v46
  %95 = vmatpush.msra.mxu0 %v45
  %96 = vmatpush.msra.mxu0 %v44
  %97 = vmatpush.msra.mxu0 %v43
  %98 = vmatpush.msra.mxu0 %v42
  %99 = vmatpush.msra.mxu0 %v41
  %100 = vmatmul.f32.gmra.mxu0 %v22
  %v101 = vpop.f32.mrf.mxu0
  %v102 = vadd.f32 %v79, %v101
  %103 = vmatmul.f32.gmra.mxu0 %v24
  %v104 = vpop.f32.mrf.mxu0
  %v105 = vadd.f32 %v82, %v104
  %106 = vdwg.mxu0
  %v107 = vmax.f32 %v102, 0.0
  %v108 = vmax.f32 %v105, 0.0
  %v109 = vld [vmem:[%s3] sm:$0x1]
  %v111 = vperm.slane %v109, 0
  %v113 = vmul.f32 %v107, %v111
  %v114 = vmul.f32 %v108, %v111
  %vm115 = vcmask 64512
  %v116 = vsel %vm115, %v113, 0.0
  %117 = vadd.xlane.f32.xlu0 %v116
  %v118 = vpop.xlane.xlu0 %117
  %v119 = vsel %vm115, %v114, 0.0
  %120 = vadd.xlane.f32.xlu0 %v119
  %v121 = vpop.xlane.xlu0 %120
  %s122 = sld [smem:[#allocation2]]
  %v123 = vstv %s122
  %v124 = vadd.f32 %v118, %v123
  %v125 = vadd.f32 %v121, %v123
  %vm126 = vcmask 7168
  %127 = vst.msk [vmem:[%s5] sm:$0xff] %vm126, %v124
  %128 = vst.msk [vmem:[%s5 + $0x8] sm:$0xff] %vm126, %v125
  // Predicated region
  $region22: #{tpu_custom_call.1} parent=0 // pred_check
    _
  $region23: #{tpu_custom_call.1} parent=0 // pred_check_branch
    %130 = sbr.rel (0) target = $region25
  $region24: #{tpu_custom_call.1} parent=0 // pred_region
    _
  $region25: #{tpu_custom_call.1} parent=0 // pred_fallthru
    _
  // Predicated region
  $region26: #{tpu_custom_call.1} parent=0 // pred_check
    _
  $region27: #{tpu_custom_call.1} parent=0 // pred_check_branch
    %132 = sbr.rel (0) target = $region29
  $region28: #{tpu_custom_call.1} parent=0 // pred_region
    _
  $region29: #{tpu_custom_call.1} parent=0 // pred_fallthru
    _

</llo_original>
